<compile_context>
chip_gen: v7x
topology: tpu7x:2x2x1
jax: 0.10.0
libtpu: 0.0.40
codegen_flags: <defaults>
</compile_context>

<pallas_src>
import math

import jax
import jax.numpy as jnp
from jax.experimental import pallas as pl
from jax.experimental.pallas import tpu as pltpu


def _make_arc_margin_kernel(s, cos_m, sin_m, th, mm, easy_margin, ls_eps,
                            out_features, tile_n, compute_dtype):
    eps2 = 1e-12 * 1e-12  # F.normalize eps, squared (we clamp squared norms)

    def kernel(x_ref, w_ref, label_ref, out_ref):
        x = x_ref[...].astype(jnp.float32)        # (TB, K)
        w = w_ref[...].astype(jnp.float32)        # (TN, K)
        label = label_ref[...]                    # (TB, 1) int32

        # Inverse L2 norms; normalization is applied to the dot output
        # instead of re-writing the operand tiles.
        inv_xn = jax.lax.rsqrt(
            jnp.maximum(jnp.sum(x * x, axis=1, keepdims=True), eps2))  # (TB, 1)
        inv_wn = jax.lax.rsqrt(
            jnp.maximum(jnp.sum(w * w, axis=1), eps2))                 # (TN,)

        # cosine tile: contract K of x against K of w (weight stays (N, K),
        # no transpose fed to the MXU).
        raw = jax.lax.dot_general(
            x.astype(compute_dtype), w.astype(compute_dtype),
            dimension_numbers=(((1,), (1,)), ((), ())),
            preferred_element_type=jnp.float32)                        # (TB, TN)
        cosine = raw * inv_xn * inv_wn[None, :]

        # Margin math: cos(theta + m). Clamp 1 - cos^2 against fp overshoot.
        sine = jnp.sqrt(jnp.maximum(1.0 - cosine * cosine, 0.0))
        phi = cosine * cos_m - sine * sin_m
        if easy_margin:
            phi = jnp.where(cosine > 0.0, phi, cosine)
        else:
            phi = jnp.where(cosine > th, phi, cosine - mm)

        # Target-class mask for this column tile (iota offset by tile base).
        tb, tn = cosine.shape
        col0 = pl.program_id(1) * tile_n
        class_ids = col0 + jax.lax.broadcasted_iota(jnp.int32, (tb, tn), 1)
        is_target = class_ids == label            # label (TB, 1) broadcasts

        if ls_eps > 0.0:
            one_hot = (1.0 - ls_eps) * is_target.astype(jnp.float32) \
                + (ls_eps / out_features)
            out = (cosine + one_hot * (phi - cosine)) * s
        else:
            out = jnp.where(is_target, phi, cosine) * s

        out_ref[...] = out.astype(out_ref.dtype)

    return kernel


def arc_margin_product(x, weight, label, *, s=30.0, m=0.5, easy_margin=False,
                       ls_eps=0.0, block_b=256, block_n=512,
                       compute_dtype=jnp.float32):
    """ArcFace margin head forward.

    x:      (B, in_features) float
    weight: (out_features, in_features) float  (PyTorch Parameter layout)
    label:  (B,) int
    returns (B, out_features) float32

    compute_dtype=jnp.bfloat16 runs the MXU at full rate (lower HBM/VMEM
    traffic too) at the cost of ~1e-3 shifts in cosine near the margin
    threshold; default f32 keeps bit-faithful semantics vs the PyTorch module.
    """
    B, K = x.shape
    N, Kw = weight.shape
    assert K == Kw, (K, Kw)

    cos_m = math.cos(m)
    sin_m = math.sin(m)
    th = math.cos(math.pi - m)
    mm = math.sin(math.pi - m) * m

    # Tile sizes: multiples of (8, 128) or the full dimension (legal blocks).
    tb = B if B <= block_b else block_b   # block_b is a multiple of 8
    tn = N if N <= block_n else block_n   # block_n is a multiple of 128
    grid = (pl.cdiv(B, tb), pl.cdiv(N, tn))

    label2d = label.reshape(B, 1).astype(jnp.int32)

    kernel = _make_arc_margin_kernel(
        s, cos_m, sin_m, th, mm, easy_margin, ls_eps, N, tn, compute_dtype)

    return pl.pallas_call(
        kernel,
        out_shape=jax.ShapeDtypeStruct((B, N), jnp.float32),
        grid=grid,
        in_specs=[
            pl.BlockSpec((tb, K), lambda i, j: (i, 0)),   # activations
            pl.BlockSpec((tn, K), lambda i, j: (j, 0)),   # streamed weight rows
            pl.BlockSpec((tb, 1), lambda i, j: (i, 0)),   # labels
        ],
        out_specs=pl.BlockSpec((tb, tn), lambda i, j: (i, j)),
        compiler_params=pltpu.CompilerParams(
            dimension_semantics=("parallel", "parallel"),
            vmem_limit_bytes=48 << 20,
        ),
    )(x, weight, label2d)


if __name__ == "__main__":
    # Small shapes consistent with the module's forward.
    B, in_features, out_features = 8, 64, 32

    key = jax.random.PRNGKey(0)
    kx, kw, kl = jax.random.split(key, 3)

    x = jax.random.normal(kx, (B, in_features), dtype=jnp.float32)

    # Xavier-uniform init for weight (out_features, in_features), deterministic.
    bound = math.sqrt(6.0 / (in_features + out_features))
    weight = jax.random.uniform(
        kw, (out_features, in_features), dtype=jnp.float32,
        minval=-bound, maxval=bound)

    label = jax.random.randint(kl, (B,), 0, out_features, dtype=jnp.int32)

    # Pure-JAX reference (same math as the PyTorch forward).
    def ref(x, w, label, s=30.0, m=0.5, easy_margin=False, ls_eps=0.0):
        eps = 1e-12
        xn = x / jnp.maximum(jnp.linalg.norm(x, axis=1, keepdims=True), eps)
        wn = w / jnp.maximum(jnp.linalg.norm(w, axis=1, keepdims=True), eps)
        cosine = xn @ wn.T
        sine = jnp.sqrt(1.0 - cosine ** 2)
        cos_m, sin_m = math.cos(m), math.sin(m)
        th = math.cos(math.pi - m)
        mm = math.sin(math.pi - m) * m
        phi = cosine * cos_m - sine * sin_m
        if easy_margin:
            phi = jnp.where(cosine > 0, phi, cosine)
        else:
            phi = jnp.where(cosine > th, phi, cosine - mm)
        one_hot = jax.nn.one_hot(label, w.shape[0], dtype=jnp.float32)
        if ls_eps > 0:
            one_hot = (1 - ls_eps) * one_hot + ls_eps / w.shape[0]
        return (one_hot * phi + (1.0 - one_hot) * cosine) * s

    configs = [
        dict(s=30.0, m=0.5, easy_margin=False, ls_eps=0.0),
        dict(s=30.0, m=0.5, easy_margin=True, ls_eps=0.0),
        dict(s=16.0, m=0.3, easy_margin=False, ls_eps=0.1),
    ]
    for cfg in configs:
        out = arc_margin_product(x, weight, label, **cfg)
        jax.block_until_ready(out)
        expected = ref(x, weight, label, **cfg)
        assert out.shape == (B, out_features)
        assert jnp.allclose(out, expected, atol=1e-4, rtol=1e-4), \
            f"mismatch vs reference for {cfg}"

    print("KERNEL_OK")
</pallas_src>

<mosaic_0001>
module attributes {stable_mosaic.version = 11 : i64} {
  func.func @kernel(%arg0: i32, %arg1: i32, %arg2: memref<8x64xf32, #tpu.memory_space<vmem>>, %arg3: memref<32x64xf32, #tpu.memory_space<vmem>>, %arg4: memref<8x1xi32, #tpu.memory_space<vmem>>, %arg5: memref<8x32xf32, #tpu.memory_space<vmem>>) attributes {dimension_semantics = [#tpu.dimension_semantics<parallel>, #tpu.dimension_semantics<parallel>], iteration_bounds = array<i64: 1, 1>, scalar_prefetch = 0 : i64, scratch_operands = 0 : i64, tpu.core_type = #tpu.core_type<tc>, window_params = [{transform_indices = @transform_0, window_bounds = array<i64: 8, 64>}, {transform_indices = @transform_1, window_bounds = array<i64: 32, 64>}, {transform_indices = @transform_2, window_bounds = array<i64: 8, 1>}, {transform_indices = @transform_3, window_bounds = array<i64: 8, 32>}]} {
    %c0 = arith.constant 0 : index
    %c0_0 = arith.constant 0 : index
    %0 = vector.load %arg2[%c0, %c0_0] : memref<8x64xf32, #tpu.memory_space<vmem>>, vector<8x64xf32>
    %c0_1 = arith.constant 0 : index
    %c0_2 = arith.constant 0 : index
    %1 = vector.load %arg3[%c0_1, %c0_2] : memref<32x64xf32, #tpu.memory_space<vmem>>, vector<32x64xf32>
    %c0_3 = arith.constant 0 : index
    %c0_4 = arith.constant 0 : index
    %2 = vector.load %arg4[%c0_3, %c0_4] : memref<8x1xi32, #tpu.memory_space<vmem>>, vector<8x1xi32>
    %3 = arith.mulf %0, %0 : vector<8x64xf32>
    %cst = arith.constant dense<0.000000e+00> : vector<8xf32>
    %4 = vector.multi_reduction <add>, %3, %cst [1] : vector<8x64xf32> to vector<8xf32>
    %5 = vector.shape_cast %4 : vector<8xf32> to vector<8x1xf32>
    %cst_5 = arith.constant 1.000000e-24 : f32
    %6 = vector.broadcast %cst_5 : f32 to vector<8x1xf32>
    %7 = arith.maximumf %5, %6 : vector<8x1xf32>
    %8 = math.rsqrt %7 : vector<8x1xf32>
    %9 = arith.mulf %1, %1 : vector<32x64xf32>
    %cst_6 = arith.constant dense<0.000000e+00> : vector<32xf32>
    %10 = vector.multi_reduction <add>, %9, %cst_6 [1] : vector<32x64xf32> to vector<32xf32>
    %cst_7 = arith.constant 1.000000e-24 : f32
    %11 = vector.broadcast %cst_7 : f32 to vector<32xf32>
    %12 = arith.maximumf %10, %11 : vector<32xf32>
    %13 = math.rsqrt %12 : vector<32xf32>
    %cst_8 = arith.constant dense<0.000000e+00> : vector<8x32xf32>
    %14 = tpu.matmul %0, %1, %cst_8 {dimension_numbers = #tpu.dot_dimension_numbers<[1], [1], [0], [0], [0, 0, 1, 0], [], []>} : vector<8x64xf32>, vector<32x64xf32>, vector<8x32xf32> -> vector<8x32xf32>
    %15 = vector.broadcast %8 : vector<8x1xf32> to vector<8x32xf32>
    %16 = arith.mulf %14, %15 : vector<8x32xf32>
    %17 = vector.shape_cast %13 : vector<32xf32> to vector<1x32xf32>
    %18 = vector.broadcast %17 : vector<1x32xf32> to vector<8x32xf32>
    %19 = arith.mulf %16, %18 : vector<8x32xf32>
    %20 = arith.mulf %19, %19 : vector<8x32xf32>
    %cst_9 = arith.constant 1.000000e+00 : f32
    %21 = vector.broadcast %cst_9 : f32 to vector<8x32xf32>
    %22 = arith.subf %21, %20 : vector<8x32xf32>
    %cst_10 = arith.constant 0.000000e+00 : f32
    %23 = vector.broadcast %cst_10 : f32 to vector<8x32xf32>
    %24 = arith.maximumf %22, %23 : vector<8x32xf32>
    %25 = math.sqrt %24 : vector<8x32xf32>
    %cst_11 = arith.constant 0.87758255 : f32
    %26 = vector.broadcast %cst_11 : f32 to vector<8x32xf32>
    %27 = arith.mulf %19, %26 : vector<8x32xf32>
    %cst_12 = arith.constant 0.47942555 : f32
    %28 = vector.broadcast %cst_12 : f32 to vector<8x32xf32>
    %29 = arith.mulf %25, %28 : vector<8x32xf32>
    %30 = arith.subf %27, %29 : vector<8x32xf32>
    %cst_13 = arith.constant -0.87758255 : f32
    %31 = vector.broadcast %cst_13 : f32 to vector<8x32xf32>
    %32 = arith.cmpf ogt, %19, %31 : vector<8x32xf32>
    %cst_14 = arith.constant 0.239712775 : f32
    %33 = vector.broadcast %cst_14 : f32 to vector<8x32xf32>
    %34 = arith.subf %19, %33 : vector<8x32xf32>
    %35 = arith.select %32, %30, %34 : vector<8x32xi1>, vector<8x32xf32>
    %c32_i32 = arith.constant 32 : i32
    %36 = arith.muli %arg1, %c32_i32 : i32
    %37 = tpu.iota {dimensions = array<i32: 1>} : vector<8x32xi32>
    %38 = vector.broadcast %36 : i32 to vector<8x32xi32>
    %39 = arith.addi %38, %37 : vector<8x32xi32>
    %40 = vector.broadcast %2 : vector<8x1xi32> to vector<8x32xi32>
    %41 = arith.cmpi eq, %39, %40 : vector<8x32xi32>
    %42 = arith.select %41, %35, %19 : vector<8x32xi1>, vector<8x32xf32>
    %cst_15 = arith.constant 3.000000e+01 : f32
    %43 = vector.broadcast %cst_15 : f32 to vector<8x32xf32>
    %44 = arith.mulf %42, %43 : vector<8x32xf32>
    %c0_16 = arith.constant 0 : index
    %c0_17 = arith.constant 0 : index
    %45 = vector.load %arg5[%c0_16, %c0_17] : memref<8x32xf32, #tpu.memory_space<vmem>>, vector<8x32xf32>
    tpu.vector_store %arg5[%c0_16, %c0_17], %44 {strides = array<i32>} : memref<8x32xf32, #tpu.memory_space<vmem>>, vector<8x32xf32>,
    return
  }
  func.func @transform_0(%arg0: i32, %arg1: i32) -> (i32, i32) {
    %c0_i32 = arith.constant 0 : i32
    %c0_i32_0 = arith.constant 0 : i32
    return %arg0, %c0_i32 : i32, i32
  }
  func.func @transform_1(%arg0: i32, %arg1: i32) -> (i32, i32) {
    %c0_i32 = arith.constant 0 : i32
    %c0_i32_0 = arith.constant 0 : i32
    return %arg1, %c0_i32 : i32, i32
  }
  func.func @transform_2(%arg0: i32, %arg1: i32) -> (i32, i32) {
    %c0_i32 = arith.constant 0 : i32
    %c0_i32_0 = arith.constant 0 : i32
    return %arg0, %c0_i32 : i32, i32
  }
  func.func @transform_3(%arg0: i32, %arg1: i32) -> (i32, i32) {
    %c0_i32 = arith.constant 0 : i32
    return %arg0, %arg1 : i32, i32
  }
}

</mosaic_0001>

<llo_original>
// kernel: tpu_custom_call.1
$region0: #{tpu_custom_call.1}
  #allocation0 [shape = 'u32[]', space=smem, size = 0x4, offset = 0x4, fixed_abs, tag = 'smem constant byte address 0x4 - core index']
  #allocation1 [shape = 'u32[144,128]{1,0:T(1,128)}', space=vmem, size = 0x12000, scoped, tag = 'internal scratch']
  %s0 = inlined_call_operand.vmem [shape: f32[8,64], index: 0, kind: input, shape index: {}]
  %s1 = inlined_call_operand.hbm [shape: f32[32,64], index: 1, kind: input, shape index: {}]
  %s2 = inlined_call_operand.vmem [shape: s32[8,1], index: 2, kind: input, shape index: {}]
  %s3 = inlined_call_operand.hbm [shape: f32[8,32], index: 3, kind: output, shape index: {}]
  %s4 = sld [smem:[#allocation0]]
  $region26: #{tpu_custom_call.1} parent=0
    _
  %s6 = ssub.s32 1, %s4
  %s7 = scalar_select 0, %s6, %s4
  $region1: #{tpu_custom_call.1} parent=0
    #allocation2 [shape = 'u8[16384]{0}', space=vmem, size = 0x4000, scoped, tag = 'input window, operand 1, single buffered']
    #allocation3 [shape = 's32[1]{0}', space=sflag, size = 0x4, scoped, tag = 'scoped memory for tpu_custom_call.1']
    #allocation4 [shape = 's32[1]{0}', space=sflag, size = 0x4, scoped, tag = 'scoped memory for tpu_custom_call.1']
    #allocation5 [shape = 'u8[4096]{0}', space=vmem, size = 0x1000, scoped, tag = 'output window, operand 0, single buffered']
    %8 = vsyncpa [#allocation3], 0
    %9 = vsyncpa [#allocation4], 0
    // Predicated region
    $region2: #{tpu_custom_call.1} parent=1 // pred_check
      _
    $region3: #{tpu_custom_call.1} parent=1 // pred_check_branch
      %11 = sbr.rel (0) target = $region5
    $region4: #{tpu_custom_call.1} parent=1 // pred_region
      _
    $region5: #{tpu_custom_call.1} parent=1 // pred_fallthru
      _
    // Predicated region
    $region6: #{tpu_custom_call.1} parent=1 // pred_check
      _
    $region7: #{tpu_custom_call.1} parent=1 // pred_check_branch
      %13 = sbr.rel (0) target = $region9
    $region8: #{tpu_custom_call.1} parent=1 // pred_region
      %s15 = ssub.s32 512, 512
      %16 = vsyncadd [#allocation3], %s15
      %s17 = sshll.u32 [#allocation2], 4
      %s18 = int_to_ptr.vmem [resolvable:$true] %s17
      %23 = dma.hbm_to_vmem [thread:$0]  %s1, 512, %s18, [#allocation3], 128, 128, 8
    $region9: #{tpu_custom_call.1} parent=1 // pred_fallthru
      _
    // Predicated region
    $region10: #{tpu_custom_call.1} parent=1 // pred_check
      _
    $region11: #{tpu_custom_call.1} parent=1 // pred_check_branch
      %25 = sbr.rel (0) target = $region13
    $region12: #{tpu_custom_call.1} parent=1 // pred_region
      _
    $region13: #{tpu_custom_call.1} parent=1 // pred_fallthru
      _
    // Predicated region
    $region14: #{tpu_custom_call.1} parent=1 // pred_check
      _
    $region15: #{tpu_custom_call.1} parent=1 // pred_check_branch
      %27 = sbr.rel (0) target = $region17
    $region16: #{tpu_custom_call.1} parent=1 // pred_region
      %28 = dma.done [#allocation3], 512
    $region17: #{tpu_custom_call.1} parent=1 // pred_fallthru
      _
    %v29 = vld [vmem:[%s0] sm:$0xff]
    %v30 = vld [vmem:[#allocation2] sm:$0xff]
    %v31 = vld [vmem:[#allocation2 + $0x8] sm:$0xff]
    %v32 = vld [vmem:[#allocation2 + $0x10] sm:$0xff]
    %v33 = vld [vmem:[#allocation2 + $0x18] sm:$0xff]
    %v34 = vld [vmem:[%s2] sm:$0xff]
    %v35 = vmul.f32 %v29, %v29
    %vm36 = vcmask 523264
    %v37 = vsel %vm36, %v35, 0.0
    %38 = vadd.xlane.f32.xlu0 %v37
    %v39 = vpop.xlane.xlu0 %38
    %v40 = vmax.f32 %v39, 1e-24
    %v41 = vrsqrt.pop %v40
    %v42 = vmul.f32 %v30, %v30
    %v43 = vmul.f32 %v31, %v31
    %v44 = vmul.f32 %v32, %v32
    %v45 = vmul.f32 %v33, %v33
    %v46 = vsel %vm36, %v42, 0.0
    %47 = vadd.xlane.f32.xlu0 %v46
    %v48 = vpop.xlane.xlu0 %47
    %v49 = vsel %vm36, %v43, 0.0
    %50 = vadd.xlane.f32.xlu0 %v49
    %v51 = vpop.xlane.xlu0 %50
    %v52 = vsel %vm36, %v44, 0.0
    %53 = vadd.xlane.f32.xlu0 %v52
    %v54 = vpop.xlane.xlu0 %53
    %v55 = vsel %vm36, %v45, 0.0
    %56 = vadd.xlane.f32.xlu0 %v55
    %v57 = vpop.xlane.xlu0 %56
    %v58 = vmax.f32 %v48, 1e-24
    %v59 = vmax.f32 %v51, 1e-24
    %v60 = vmax.f32 %v54, 1e-24
    %v61 = vmax.f32 %v57, 1e-24
    %v62 = vrsqrt.pop %v58
    %v63 = vrsqrt.pop %v59
    %v64 = vrsqrt.pop %v60
    %v65 = vrsqrt.pop %v61
    %v67 = vsel %vm36, %v29, 0
    %v70 = vsel %vm36, %v30, 0
    %v73 = vsel %vm36, %v31, 0
    %v76 = vsel %vm36, %v32, 0
    %v79 = vsel %vm36, %v33, 0
    %81 = vmatprep.subr.mxu0 0.0
    %82 = vmatpush1.xpose.msra.mxu0 %v70
    %83 = vmatprep.subr.mxu0 0.0
    %84 = vmatpush1.xpose.msra.mxu0 %v73
    %85 = vmatprep.subr.mxu0 0.0
    %86 = vmatpush1.xpose.msra.mxu0 %v76
    %87 = vmatprep.subr.mxu0 0.0
    %88 = vmatpush1.xpose.msra.mxu0 %v79
    %89 = vmatprep.subr.mxu0 0.0
    %90 = vmatpush1.xpose.msra.mxu0 0.0
    %91 = vmatprep.subr.mxu0 0.0
    %92 = vmatpush1.xpose.msra.mxu0 0.0
    %93 = vmatprep.subr.mxu0 0.0
    %94 = vmatpush1.xpose.msra.mxu0 0.0
    %95 = vmatprep.subr.mxu0 0.0
    %96 = vmatpush1.xpose.msra.mxu0 0.0
    %97 = vmatprep.subr.mxu0 0.0
    %98 = vmatpush1.xpose.msra.mxu0 0.0
    %99 = vmatprep.subr.mxu0 0.0
    %100 = vmatpush1.xpose.msra.mxu0 0.0
    %101 = vmatprep.subr.mxu0 0.0
    %102 = vmatpush1.xpose.msra.mxu0 0.0
    %103 = vmatprep.subr.mxu0 0.0
    %104 = vmatpush1.xpose.msra.mxu0 0.0
    %105 = vmatprep.subr.mxu0 0.0
    %106 = vmatpush1.xpose.msra.mxu0 0.0
    %107 = vmatprep.subr.mxu0 0.0
    %108 = vmatpush1.xpose.msra.mxu0 0.0
    %109 = vmatprep.subr.mxu0 0.0
    %110 = vmatpush1.xpose.msra.mxu0 0.0
    %111 = vmatprep.subr.mxu0 0.0
    %112 = vmatpush1.xpose.msra.mxu0 0.0
    %113 = vmatprep.subr.mxu0 0.0
    %114 = vmatpush1.xpose.msra.mxu0 0.0
    %115 = vmatprep.subr.mxu0 0.0
    %116 = vmatpush1.xpose.msra.mxu0 0.0
    %117 = vmatprep.subr.mxu0 0.0
    %118 = vmatpush1.xpose.msra.mxu0 0.0
    %119 = vmatprep.subr.mxu0 0.0
    %120 = vmatpush1.xpose.msra.mxu0 0.0
    %121 = vmatprep.subr.mxu0 0.0
    %122 = vmatpush1.xpose.msra.mxu0 0.0
    %123 = vmatprep.subr.mxu0 0.0
    %124 = vmatpush1.xpose.msra.mxu0 0.0
    %125 = vmatprep.subr.mxu0 0.0
    %126 = vmatpush1.xpose.msra.mxu0 0.0
    %127 = vmatprep.subr.mxu0 0.0
    %128 = vmatpush1.xpose.msra.mxu0 0.0
    %129 = vmatprep.subr.mxu0 0.0
    %130 = vmatpush1.xpose.msra.mxu0 0.0
    %131 = vmatprep.subr.mxu0 0.0
    %132 = vmatpush1.xpose.msra.mxu0 0.0
    %133 = vmatprep.subr.mxu0 0.0
    %134 = vmatpush1.xpose.msra.mxu0 0.0
    %135 = vmatprep.subr.mxu0 0.0
    %136 = vmatpush1.xpose.msra.mxu0 0.0
    %137 = vmatprep.subr.mxu0 0.0
    %138 = vmatpush1.xpose.msra.mxu0 0.0
    %139 = vmatprep.subr.mxu0 0.0
    %140 = vmatpush1.xpose.msra.mxu0 0.0
    %141 = vmatprep.subr.mxu0 0.0
    %142 = vmatpush1.xpose.msra.mxu0 0.0
    %143 = vmatprep.subr.mxu0 0.0
    %144 = vmatpush1.xpose.msra.mxu0 0.0
    %145 = vmatprep.mubr.f32.mxu0 0.0
    %146 = vmatmul.mubr.f32.gmra.mrb[0].mxu0 %v67
    %v147 = vpop.f32.mrb[0].mxu0
    %v148 = vadd.f32 0.0, %v147
    %v149 = vpop.f32.mrb[0].mxu0
    %150 = vdwg.mxu0
    %v151 = vmul.f32 %v148, %v41
    %v156 = vlaneseq
    %v157 = vand.u32 %v156, 127
    %v158 = vlaneseq
    %v159 = vshrl.u32 %v158, 7
    %v160 = vsub.s32 %v157, %v159
    %v161 = vrot.slane %v62, %v160
    %v162 = vadd.s32 %v157, 4294967288
    %v163 = vlaneseq
    %v164 = vshrl.u32 %v163, 7
    %v165 = vsub.s32 %v162, %v164
    %v166 = vrot.slane %v63, %v165
    %vm167 = vcmask 130112
    %v168 = vsel %vm167, %v166, %v161
    %v169 = vadd.s32 %v157, 4294967280
    %v170 = vlaneseq
    %v171 = vshrl.u32 %v170, 7
    %v172 = vsub.s32 %v169, %v171
    %v173 = vrot.slane %v64, %v172
    %vm174 = vcmask 195712
    %v175 = vsel %vm174, %v173, %v168
    %v176 = vadd.s32 %v157, 4294967272
    %v177 = vlaneseq
    %v178 = vshrl.u32 %v177, 7
    %v179 = vsub.s32 %v176, %v178
    %v180 = vrot.slane %v65, %v179
    %vm181 = vcmask 261312
    %v182 = vsel %vm181, %v180, %v175
    %vm183 = vcmask 1042434
    %v184 = vsel %vm183, %v182, %v182
    %vm185 = vcmask 1043459
    %v186 = vsel %vm185, %v182, %v184
    %vm187 = vcmask 1044484
    %v188 = vsel %vm187, %v182, %v186
    %vm189 = vcmask 1045509
    %v190 = vsel %vm189, %v182, %v188
    %vm191 = vcmask 1046534
    %v192 = vsel %vm191, %v182, %v190
    %vm193 = vcmask 1047559
    %v194 = vsel %vm193, %v182, %v192
    %v196 = vmul.f32 %v151, %v194
    %v197 = vmul.f32 %v196, %v196
    %v198 = vsub.f32 1.0, %v197
    %v199 = vmax.f32 %v198, 0.0
    %v200 = vrsqrt.pop %v199
    %v201 = vmul.f32 %v199, %v200
    %vm202 = vcmp.eq.f32.partialorder %v199, inf
    %v203 = vsel %vm202, %v199, %v201
    %vm204 = vcmp.eq.f32.partialorder %v199, 0.0
    %v205 = vand.u32 %v199, 2147483648
    %v206 = vsel %vm204, %v205, %v203
    %v207 = vmul.f32 %v196, 0.87758255
    %v208 = vmul.f32 %v206, 0.47942555
    %v209 = vsub.f32 %v207, %v208
    %vm210 = vcmp.gt.f32.partialorder %v196, -0.87758255
    %v211 = vsub.f32 %v196, 0.23971277
    %v212 = vsel %vm210, %v209, %v211
    %s213 = smul.u32 0, 32
    %v214 = vstv %s213
    %v215 = vadd.s32 %v214, %v157
    %216 = vset.pattern.permute.xlu0 0
    %217 = vperm.xlu0 %216, %v34
    %v218 = vpop.permute.xlu0 %217
    %vm219 = vcmp.eq.s32.totalorder %v215, %v218
    %v220 = vsel %vm219, %v212, %v196
    %v221 = vmul.f32 %v220, 30.0
    %vm222 = vcmask 261120
    %223 = vst.msk [vmem:[#allocation5] sm:$0xff] %vm222, %v221
    // Predicated region
    $region18: #{tpu_custom_call.1} parent=1 // pred_check
      _
    $region19: #{tpu_custom_call.1} parent=1 // pred_check_branch
      %225 = sbr.rel (0) target = $region21
    $region20: #{tpu_custom_call.1} parent=1 // pred_region
      %s227 = ssub.s32 128, 128
      %228 = vsyncadd [#allocation4], %s227
      %s230 = sshll.u32 [#allocation5], 4
      %s231 = int_to_ptr.vmem [resolvable:$true] %s230
      %233 = dma.vmem_to_hbm [thread:$0]  %s231, 128, %s3, [#allocation4]
    $region21: #{tpu_custom_call.1} parent=1 // pred_fallthru
      _
    // Predicated region
    $region22: #{tpu_custom_call.1} parent=1 // pred_check
      _
    $region23: #{tpu_custom_call.1} parent=1 // pred_check_branch
      %235 = sbr.rel (0) target = $region25
    $region24: #{tpu_custom_call.1} parent=1 // pred_region
      %236 = dma.done [#allocation4], 128
    $region25: #{tpu_custom_call.1} parent=1 // pred_fallthru
      _
    %237 = vsyncpa [#allocation3], 1
    %238 = vsyncpa [#allocation4], 1

</llo_original>
